<compile_context>
chip_gen: v7x
topology: tpu7x:2x2x1
jax: 0.10.0
libtpu: 0.0.40
codegen_flags: <defaults>
</compile_context>

<pallas_src>
import jax
import jax.numpy as jnp
from jax.experimental import pallas as pl
from jax.experimental.pallas import tpu as pltpu

F_PAD = 128                     # lane-dense padded feature width for hidden layers
OUT_PAD = 8                     # narrow output width (D_OUT=5 padded to 8)
D_IN, D_H1, D_H2, D_OUT = 8, 10, 8, 5


def mlp_kernel(x_ref, w_ref, b_ref, o_ref):
    # x_ref: (TB, 8)  w_ref: (3, 128, 128)  b_ref: (3, 1, 128)  o_ref: (TB, 8)
    x = x_ref[...]                                                   # (TB, 8)

    # ---- Layer 1: K=8 dot on the MXU (MXU is essentially idle, so this is free).
    h = jnp.dot(x, w_ref[0, :D_IN, :],
                preferred_element_type=jnp.float32) + b_ref[0]       # (TB, 128)
    h = jnp.maximum(h, 0.0)

    # ---- Layers 2 & 3: lane-dense (TB,128)@(128,128) MXU dots, f32 accumulation.
    h = jnp.dot(h, w_ref[1], preferred_element_type=jnp.float32) + b_ref[1]
    h = jnp.maximum(h, 0.0)
    h = jnp.dot(h, w_ref[2], preferred_element_type=jnp.float32) + b_ref[2]

    # ---- Narrow store: only the first OUT_PAD lanes go back to HBM.
    o_ref[...] = jnp.maximum(h[:, :OUT_PAD], 0.0).astype(o_ref.dtype)


def _round_up(n, m):
    return ((n + m - 1) // m) * m


def pack_params(w1, b1, w2, b2, w3, b3):
    """Zero-pad each layer's features to 128 lanes and pack all weights / biases
    into two arrays (done once, not per call). Padded lanes are exactly zero."""
    wp = jnp.zeros((3, F_PAD, F_PAD), jnp.float32)
    wp = wp.at[0, :D_IN, :D_H1].set(w1)
    wp = wp.at[1, :D_H1, :D_H2].set(w2)
    wp = wp.at[2, :D_H2, :D_OUT].set(w3)
    bp = jnp.zeros((3, 1, F_PAD), jnp.float32)
    bp = bp.at[0, :, :D_H1].set(b1.reshape(1, -1))
    bp = bp.at[1, :, :D_H2].set(b2.reshape(1, -1))
    bp = bp.at[2, :, :D_OUT].set(b3.reshape(1, -1))
    return wp, bp


def mlp_forward(x, wp, bp, *, tb=4096):
    B = x.shape[0]
    # Batch tile: 8-row aligned, no bigger than the batch itself.
    TB = min(tb, _round_up(B, 8))
    # For big batches cap TB at ceil(B/2) so the grid has >= 2 steps and both
    # v7x TensorCores get work (no-op on v5e/v6e single-TC chips).
    half = _round_up((B + 1) // 2, 8)
    if B > 8 and TB > half:
        TB = half
    grid = (pl.cdiv(B, TB),)   # partial last block handled by Pallas (no jnp.pad copy)

    out = pl.pallas_call(
        mlp_kernel,
        out_shape=jax.ShapeDtypeStruct((B, OUT_PAD), jnp.float32),
        grid=grid,
        in_specs=[
            pl.BlockSpec((TB, D_IN), lambda i: (i, 0)),             # x: tiled over batch
            pl.BlockSpec((3, F_PAD, F_PAD), lambda i: (0, 0, 0)),   # packed weights, resident
            pl.BlockSpec((3, 1, F_PAD), lambda i: (0, 0, 0)),       # packed biases, resident
        ],
        out_specs=pl.BlockSpec((TB, OUT_PAD), lambda i: (i, 0)),    # narrow (8-lane) output
        compiler_params=pltpu.CompilerParams(
            dimension_semantics=("parallel",),                      # megacore sharding on v7x
            vmem_limit_bytes=32 * 1024 * 1024),
    )(x, wp, bp)
    return out[:, :D_OUT]


def mlp_reference(x, w1, b1, w2, b2, w3, b3):
    h = jnp.maximum(x @ w1 + b1, 0.0)
    h = jnp.maximum(h @ w2 + b2, 0.0)
    return jnp.maximum(h @ w3 + b3, 0.0)


def init_params(key):
    # Deterministic init mimicking nn.Linear's uniform(-1/sqrt(fan_in), 1/sqrt(fan_in)).
    def linear(key, fan_in, fan_out):
        kw, kb = jax.random.split(key)
        bound = 1.0 / jnp.sqrt(float(fan_in))
        w = jax.random.uniform(kw, (fan_in, fan_out), jnp.float32, -bound, bound)
        b = jax.random.uniform(kb, (1, fan_out), jnp.float32, -bound, bound)
        return w, b

    k1, k2, k3 = jax.random.split(key, 3)
    w1, b1 = linear(k1, D_IN, D_H1)
    w2, b2 = linear(k2, D_H1, D_H2)
    w3, b3 = linear(k3, D_H2, D_OUT)
    return w1, b1, w2, b2, w3, b3


if __name__ == "__main__":
    key = jax.random.PRNGKey(0)
    k_params, k_x1, k_x2 = jax.random.split(key, 3)
    params = init_params(k_params)
    wp, bp = pack_params(*params)

    # Small-shape check consistent with the module (batch=8, in_features=8).
    x_small = jax.random.normal(k_x1, (8, D_IN), dtype=jnp.float32)
    out_small = jax.block_until_ready(mlp_forward(x_small, wp, bp))
    ref_small = mlp_reference(x_small, *params)
    assert out_small.shape == (8, D_OUT)
    assert jnp.allclose(out_small, ref_small, atol=1e-4, rtol=1e-4)

    # Exercise the multi-step grid + partial-last-block path (non-multiple batch).
    x_big = jax.random.normal(k_x2, (1027, D_IN), dtype=jnp.float32)
    out_big = jax.block_until_ready(mlp_forward(x_big, wp, bp))
    ref_big = mlp_reference(x_big, *params)
    assert out_big.shape == (1027, D_OUT)
    assert jnp.allclose(out_big, ref_big, atol=1e-4, rtol=1e-4)

    print("KERNEL_OK")
</pallas_src>

<mosaic_0001>
module attributes {stable_mosaic.version = 11 : i64} {
  func.func @mlp_kernel(%arg0: i32, %arg1: memref<8x8xf32, #tpu.memory_space<vmem>>, %arg2: memref<3x128x128xf32, #tpu.memory_space<vmem>>, %arg3: memref<3x1x128xf32, #tpu.memory_space<vmem>>, %arg4: memref<8x8xf32, #tpu.memory_space<vmem>>) attributes {dimension_semantics = [#tpu.dimension_semantics<parallel>], iteration_bounds = array<i64: 1>, scalar_prefetch = 0 : i64, scratch_operands = 0 : i64, tpu.core_type = #tpu.core_type<tc>, window_params = [{transform_indices = @transform_0, window_bounds = array<i64: 8, 8>}, {pipeline_mode = #tpu.pipeline_mode<synchronous>, transform_indices = @transform_1, window_bounds = array<i64: 3, 128, 128>}, {pipeline_mode = #tpu.pipeline_mode<synchronous>, transform_indices = @transform_2, window_bounds = array<i64: 3, 1, 128>}, {transform_indices = @transform_3, window_bounds = array<i64: 8, 8>}]} {
    %c0 = arith.constant 0 : index
    %c0_0 = arith.constant 0 : index
    %0 = vector.load %arg1[%c0, %c0_0] : memref<8x8xf32, #tpu.memory_space<vmem>>, vector<8x8xf32>
    %c0_1 = arith.constant 0 : index
    %c0_2 = arith.constant 0 : index
    %c0_3 = arith.constant 0 : index
    %1 = vector.load %arg2[%c0_1, %c0_2, %c0_3] : memref<3x128x128xf32, #tpu.memory_space<vmem>>, vector<1x8x128xf32>
    %2 = vector.shape_cast %1 : vector<1x8x128xf32> to vector<8x128xf32>
    %cst = arith.constant dense<0.000000e+00> : vector<8x128xf32>
    %3 = tpu.matmul %0, %2, %cst {dimension_numbers = #tpu.dot_dimension_numbers<[1], [0], [0], [1], [0, 0, 1, 1], [], []>} : vector<8x8xf32>, vector<8x128xf32>, vector<8x128xf32> -> vector<8x128xf32>
    %c0_4 = arith.constant 0 : index
    %c0_5 = arith.constant 0 : index
    %c0_6 = arith.constant 0 : index
    %4 = vector.load %arg3[%c0_4, %c0_5, %c0_6] : memref<3x1x128xf32, #tpu.memory_space<vmem>>, vector<1x1x128xf32>
    %5 = vector.shape_cast %4 : vector<1x1x128xf32> to vector<1x128xf32>
    %6 = vector.broadcast %5 : vector<1x128xf32> to vector<8x128xf32>
    %7 = arith.addf %3, %6 : vector<8x128xf32>
    %cst_7 = arith.constant 0.000000e+00 : f32
    %8 = vector.broadcast %cst_7 : f32 to vector<8x128xf32>
    %9 = arith.maximumf %7, %8 : vector<8x128xf32>
    %c1 = arith.constant 1 : index
    %c0_8 = arith.constant 0 : index
    %c0_9 = arith.constant 0 : index
    %10 = vector.load %arg2[%c1, %c0_8, %c0_9] : memref<3x128x128xf32, #tpu.memory_space<vmem>>, vector<1x128x128xf32>
    %11 = vector.shape_cast %10 : vector<1x128x128xf32> to vector<128x128xf32>
    %cst_10 = arith.constant dense<0.000000e+00> : vector<8x128xf32>
    %12 = tpu.matmul %9, %11, %cst_10 {dimension_numbers = #tpu.dot_dimension_numbers<[1], [0], [0], [1], [0, 0, 1, 1], [], []>} : vector<8x128xf32>, vector<128x128xf32>, vector<8x128xf32> -> vector<8x128xf32>
    %c1_11 = arith.constant 1 : index
    %c0_12 = arith.constant 0 : index
    %c0_13 = arith.constant 0 : index
    %13 = vector.load %arg3[%c1_11, %c0_12, %c0_13] : memref<3x1x128xf32, #tpu.memory_space<vmem>>, vector<1x1x128xf32>
    %14 = vector.shape_cast %13 : vector<1x1x128xf32> to vector<1x128xf32>
    %15 = vector.broadcast %14 : vector<1x128xf32> to vector<8x128xf32>
    %16 = arith.addf %12, %15 : vector<8x128xf32>
    %cst_14 = arith.constant 0.000000e+00 : f32
    %17 = vector.broadcast %cst_14 : f32 to vector<8x128xf32>
    %18 = arith.maximumf %16, %17 : vector<8x128xf32>
    %c2 = arith.constant 2 : index
    %c0_15 = arith.constant 0 : index
    %c0_16 = arith.constant 0 : index
    %19 = vector.load %arg2[%c2, %c0_15, %c0_16] : memref<3x128x128xf32, #tpu.memory_space<vmem>>, vector<1x128x128xf32>
    %20 = vector.shape_cast %19 : vector<1x128x128xf32> to vector<128x128xf32>
    %cst_17 = arith.constant dense<0.000000e+00> : vector<8x128xf32>
    %21 = tpu.matmul %18, %20, %cst_17 {dimension_numbers = #tpu.dot_dimension_numbers<[1], [0], [0], [1], [0, 0, 1, 1], [], []>} : vector<8x128xf32>, vector<128x128xf32>, vector<8x128xf32> -> vector<8x128xf32>
    %c2_18 = arith.constant 2 : index
    %c0_19 = arith.constant 0 : index
    %c0_20 = arith.constant 0 : index
    %22 = vector.load %arg3[%c2_18, %c0_19, %c0_20] : memref<3x1x128xf32, #tpu.memory_space<vmem>>, vector<1x1x128xf32>
    %23 = vector.shape_cast %22 : vector<1x1x128xf32> to vector<1x128xf32>
    %24 = vector.broadcast %23 : vector<1x128xf32> to vector<8x128xf32>
    %25 = arith.addf %21, %24 : vector<8x128xf32>
    %26 = vector.extract_strided_slice %25 {offsets = [0, 0], sizes = [8, 8], strides = [1, 1]} : vector<8x128xf32> to vector<8x8xf32>
    %cst_21 = arith.constant 0.000000e+00 : f32
    %27 = vector.broadcast %cst_21 : f32 to vector<8x8xf32>
    %28 = arith.maximumf %26, %27 : vector<8x8xf32>
    %c0_22 = arith.constant 0 : index
    %c0_23 = arith.constant 0 : index
    %29 = vector.load %arg4[%c0_22, %c0_23] : memref<8x8xf32, #tpu.memory_space<vmem>>, vector<8x8xf32>
    tpu.vector_store %arg4[%c0_22, %c0_23], %28 {strides = array<i32>} : memref<8x8xf32, #tpu.memory_space<vmem>>, vector<8x8xf32>,
    return
  }
  func.func @transform_0(%arg0: i32) -> (i32, i32) {
    %c0_i32 = arith.constant 0 : i32
    %c0_i32_0 = arith.constant 0 : i32
    return %arg0, %c0_i32 : i32, i32
  }
  func.func @transform_1(%arg0: i32) -> (i32, i32, i32) {
    %c0_i32 = arith.constant 0 : i32
    %c0_i32_0 = arith.constant 0 : i32
    %c0_i32_1 = arith.constant 0 : i32
    %c0_i32_2 = arith.constant 0 : i32
    return %c0_i32, %c0_i32_0, %c0_i32_1 : i32, i32, i32
  }
  func.func @transform_2(%arg0: i32) -> (i32, i32, i32) {
    %c0_i32 = arith.constant 0 : i32
    %c0_i32_0 = arith.constant 0 : i32
    %c0_i32_1 = arith.constant 0 : i32
    %c0_i32_2 = arith.constant 0 : i32
    return %c0_i32, %c0_i32_0, %c0_i32_1 : i32, i32, i32
  }
  func.func @transform_3(%arg0: i32) -> (i32, i32) {
    %c0_i32 = arith.constant 0 : i32
    %c0_i32_0 = arith.constant 0 : i32
    return %arg0, %c0_i32 : i32, i32
  }
}

</mosaic_0001>

<llo_original>
// kernel: tpu_custom_call.1
$region0: #{tpu_custom_call.1}
  #allocation0 [shape = 'u32[]', space=smem, size = 0x4, offset = 0x4, fixed_abs, tag = 'smem constant byte address 0x4 - core index']
  #allocation1 [shape = 'u32[144,128]{1,0:T(1,128)}', space=vmem, size = 0x12000, scoped, tag = 'internal scratch']
  %s0 = inlined_call_operand.hbm [shape: f32[8,8], index: 0, kind: input, shape index: {}]
  %s1 = inlined_call_operand.hbm [shape: f32[3,128,128], index: 1, kind: input, shape index: {}]
  %s2 = inlined_call_operand.vmem [shape: f32[3,1,128], index: 2, kind: input, shape index: {}]
  %s3 = inlined_call_operand.hbm [shape: f32[8,8], index: 3, kind: output, shape index: {}]
  %s4 = sld [smem:[#allocation0]]
  $region30: #{tpu_custom_call.1} parent=0
    _
  %s6 = ssub.s32 1, %s4
  %s7 = scalar_select 0, %s6, %s4
  $region1: #{tpu_custom_call.1} parent=0
    #allocation2 [shape = 'u8[4096]{0}', space=vmem, size = 0x1000, scoped, tag = 'input window, operand 0, single buffered']
    #allocation3 [shape = 's32[1]{0}', space=sflag, size = 0x4, scoped, tag = 'scoped memory for tpu_custom_call.1']
    #allocation4 [shape = 's32[1]{0}', space=sflag, size = 0x4, scoped, tag = 'scoped memory for tpu_custom_call.1']
    #allocation5 [shape = 'u8[196608]{0}', space=vmem, size = 0x30000, scoped, tag = 'input window, operand 1, single buffered']
    #allocation6 [shape = 's32[1]{0}', space=sflag, size = 0x4, scoped, tag = 'scoped memory for tpu_custom_call.1']
    #allocation7 [shape = 'u8[4096]{0}', space=vmem, size = 0x1000, scoped, tag = 'output window, operand 0, single buffered']
    %8 = vsyncpa [#allocation3], 0
    %9 = vsyncpa [#allocation6], 0
    %10 = vsyncpa [#allocation4], 0
    // Predicated region
    $region2: #{tpu_custom_call.1} parent=1 // pred_check
      _
    $region3: #{tpu_custom_call.1} parent=1 // pred_check_branch
      %12 = sbr.rel (0) target = $region5
    $region4: #{tpu_custom_call.1} parent=1 // pred_region
      %s14 = ssub.s32 128, 128
      %15 = vsyncadd [#allocation3], %s14
      %s17 = sshll.u32 [#allocation2], 4
      %s18 = int_to_ptr.vmem [resolvable:$true] %s17
      %20 = dma.hbm_to_vmem [thread:$0]  %s0, 128, %s18, [#allocation3]
    $region5: #{tpu_custom_call.1} parent=1 // pred_fallthru
      _
    // Predicated region
    $region6: #{tpu_custom_call.1} parent=1 // pred_check
      _
    $region7: #{tpu_custom_call.1} parent=1 // pred_check_branch
      %22 = sbr.rel (0) target = $region9
    $region8: #{tpu_custom_call.1} parent=1 // pred_region
      %s24 = ssub.s32 6144, 6144
      %25 = vsyncadd [#allocation6], %s24
      %s26 = sshll.u32 [#allocation5], 4
      %s27 = int_to_ptr.vmem [resolvable:$true] %s26
      %32 = dma.hbm_to_vmem [thread:$0]  %s1, 6144, %s27, [#allocation6], 128, 128, 8
    $region9: #{tpu_custom_call.1} parent=1 // pred_fallthru
      _
    // Predicated region
    $region10: #{tpu_custom_call.1} parent=1 // pred_check
      _
    $region11: #{tpu_custom_call.1} parent=1 // pred_check_branch
      %34 = sbr.rel (0) target = $region13
    $region12: #{tpu_custom_call.1} parent=1 // pred_region
      _
    $region13: #{tpu_custom_call.1} parent=1 // pred_fallthru
      _
    // Predicated region
    $region14: #{tpu_custom_call.1} parent=1 // pred_check
      _
    $region15: #{tpu_custom_call.1} parent=1 // pred_check_branch
      %36 = sbr.rel (0) target = $region17
    $region16: #{tpu_custom_call.1} parent=1 // pred_region
      %37 = dma.done [#allocation3], 128
    $region17: #{tpu_custom_call.1} parent=1 // pred_fallthru
      _
    // Predicated region
    $region18: #{tpu_custom_call.1} parent=1 // pred_check
      _
    $region19: #{tpu_custom_call.1} parent=1 // pred_check_branch
      %39 = sbr.rel (0) target = $region21
    $region20: #{tpu_custom_call.1} parent=1 // pred_region
      %40 = dma.done [#allocation6], 6144
    $region21: #{tpu_custom_call.1} parent=1 // pred_fallthru
      _
    %v41 = vld [vmem:[#allocation2] sm:$0xff]
    %v42 = vld [vmem:[#allocation5] sm:$0xff]
    %v43 = vld [vmem:[%s2] sm:$0x1]
    %v45 = vlaneseq
    %v46 = vshrl.u32 %v45, 7
    %v47 = vsub.s32 0, %v46
    %v48 = vrot.slane %v43, %v47
    %vm50 = vcmask 64512
    %v52 = vsel %vm50, %v41, 0
    %54 = vmatprep.subr.mxu0 0.0
    %55 = vmatpush1.msra.mxu0 %v42
    %56 = vmatprep.subr.mxu0 0.0
    %57 = vmatpush1.msra.mxu0 0.0
    %58 = vmatprep.subr.mxu0 0.0
    %59 = vmatpush1.msra.mxu0 0.0
    %60 = vmatprep.subr.mxu0 0.0
    %61 = vmatpush1.msra.mxu0 0.0
    %62 = vmatprep.subr.mxu0 0.0
    %63 = vmatpush1.msra.mxu0 0.0
    %64 = vmatprep.subr.mxu0 0.0
    %65 = vmatpush1.msra.mxu0 0.0
    %66 = vmatprep.subr.mxu0 0.0
    %67 = vmatpush1.msra.mxu0 0.0
    %68 = vmatprep.subr.mxu0 0.0
    %69 = vmatpush1.msra.mxu0 0.0
    %70 = vmatprep.subr.mxu0 0.0
    %71 = vmatpush1.msra.mxu0 0.0
    %72 = vmatprep.subr.mxu0 0.0
    %73 = vmatpush1.msra.mxu0 0.0
    %74 = vmatprep.subr.mxu0 0.0
    %75 = vmatpush1.msra.mxu0 0.0
    %76 = vmatprep.subr.mxu0 0.0
    %77 = vmatpush1.msra.mxu0 0.0
    %78 = vmatprep.subr.mxu0 0.0
    %79 = vmatpush1.msra.mxu0 0.0
    %80 = vmatprep.subr.mxu0 0.0
    %81 = vmatpush1.msra.mxu0 0.0
    %82 = vmatprep.subr.mxu0 0.0
    %83 = vmatpush1.msra.mxu0 0.0
    %84 = vmatprep.subr.mxu0 0.0
    %85 = vmatpush1.msra.mxu0 0.0
    %86 = vmatprep.subr.mxu0 0.0
    %87 = vmatpush1.msra.mxu0 0.0
    %88 = vmatprep.subr.mxu0 0.0
    %89 = vmatpush1.msra.mxu0 0.0
    %90 = vmatprep.subr.mxu0 0.0
    %91 = vmatpush1.msra.mxu0 0.0
    %92 = vmatprep.subr.mxu0 0.0
    %93 = vmatpush1.msra.mxu0 0.0
    %94 = vmatprep.subr.mxu0 0.0
    %95 = vmatpush1.msra.mxu0 0.0
    %96 = vmatprep.subr.mxu0 0.0
    %97 = vmatpush1.msra.mxu0 0.0
    %98 = vmatprep.subr.mxu0 0.0
    %99 = vmatpush1.msra.mxu0 0.0
    %100 = vmatprep.subr.mxu0 0.0
    %101 = vmatpush1.msra.mxu0 0.0
    %102 = vmatprep.subr.mxu0 0.0
    %103 = vmatpush1.msra.mxu0 0.0
    %104 = vmatprep.subr.mxu0 0.0
    %105 = vmatpush1.msra.mxu0 0.0
    %106 = vmatprep.subr.mxu0 0.0
    %107 = vmatpush1.msra.mxu0 0.0
    %108 = vmatprep.subr.mxu0 0.0
    %109 = vmatpush1.msra.mxu0 0.0
    %110 = vmatprep.subr.mxu0 0.0
    %111 = vmatpush1.msra.mxu0 0.0
    %112 = vmatprep.subr.mxu0 0.0
    %113 = vmatpush1.msra.mxu0 0.0
    %114 = vmatprep.subr.mxu0 0.0
    %115 = vmatpush1.msra.mxu0 0.0
    %116 = vmatprep.subr.mxu0 0.0
    %117 = vmatpush1.msra.mxu0 0.0
    %118 = vmatprep.mubr.f32.mxu0 0.0
    %119 = vmatmul.mubr.f32.gmra.mrb[0].mxu0 %v52
    %v120 = vpop.f32.mrb[0].mxu0
    %v121 = vadd.f32 %v48, %v120
    %v122 = vpop.f32.mrb[0].mxu0
    %123 = vdwg.mxu0
    %v124 = vmax.f32 %v121, 0.0
    %s125 = scalar_lea.vmem [#allocation5], 128
    %v126 = vld [vmem:[%s125] sm:$0xff]
    %v127 = vld [vmem:[%s125 + $0x8] sm:$0xff]
    %v128 = vld [vmem:[%s125 + $0x10] sm:$0xff]
    %v129 = vld [vmem:[%s125 + $0x18] sm:$0xff]
    %v130 = vld [vmem:[%s125 + $0x20] sm:$0xff]
    %v131 = vld [vmem:[%s125 + $0x28] sm:$0xff]
    %v132 = vld [vmem:[%s125 + $0x30] sm:$0xff]
    %v133 = vld [vmem:[%s125 + $0x38] sm:$0xff]
    %v134 = vld [vmem:[%s125 + $0x40] sm:$0xff]
    %v135 = vld [vmem:[%s125 + $0x48] sm:$0xff]
    %v136 = vld [vmem:[%s125 + $0x50] sm:$0xff]
    %v137 = vld [vmem:[%s125 + $0x58] sm:$0xff]
    %v138 = vld [vmem:[%s125 + $0x60] sm:$0xff]
    %v139 = vld [vmem:[%s125 + $0x68] sm:$0xff]
    %v140 = vld [vmem:[%s125 + $0x70] sm:$0xff]
    %v141 = vld [vmem:[%s125 + $0x78] sm:$0xff]
    %s142 = scalar_lea.vmem %s2, 1
    %v143 = vld [vmem:[%s142] sm:$0x1]
    %v145 = vlaneseq
    %v146 = vshrl.u32 %v145, 7
    %v147 = vsub.s32 0, %v146
    %v148 = vrot.slane %v143, %v147
    %150 = vmatprep.subr.mxu0 0.0
    %151 = vmatpush1.msra.mxu0 %v126
    %152 = vmatprep.subr.mxu0 0.0
    %153 = vmatpush1.msra.mxu0 %v127
    %154 = vmatprep.subr.mxu0 0.0
    %155 = vmatpush1.msra.mxu0 %v128
    %156 = vmatprep.subr.mxu0 0.0
    %157 = vmatpush1.msra.mxu0 %v129
    %158 = vmatprep.subr.mxu0 0.0
    %159 = vmatpush1.msra.mxu0 %v130
    %160 = vmatprep.subr.mxu0 0.0
    %161 = vmatpush1.msra.mxu0 %v131
    %162 = vmatprep.subr.mxu0 0.0
    %163 = vmatpush1.msra.mxu0 %v132
    %164 = vmatprep.subr.mxu0 0.0
    %165 = vmatpush1.msra.mxu0 %v133
    %166 = vmatprep.subr.mxu0 0.0
    %167 = vmatpush1.msra.mxu0 %v134
    %168 = vmatprep.subr.mxu0 0.0
    %169 = vmatpush1.msra.mxu0 %v135
    %170 = vmatprep.subr.mxu0 0.0
    %171 = vmatpush1.msra.mxu0 %v136
    %172 = vmatprep.subr.mxu0 0.0
    %173 = vmatpush1.msra.mxu0 %v137
    %174 = vmatprep.subr.mxu0 0.0
    %175 = vmatpush1.msra.mxu0 %v138
    %176 = vmatprep.subr.mxu0 0.0
    %177 = vmatpush1.msra.mxu0 %v139
    %178 = vmatprep.subr.mxu0 0.0
    %179 = vmatpush1.msra.mxu0 %v140
    %180 = vmatprep.subr.mxu0 0.0
    %181 = vmatpush1.msra.mxu0 %v141
    %182 = vmatprep.subr.mxu0 0.0
    %183 = vmatpush1.msra.mxu0 0.0
    %184 = vmatprep.subr.mxu0 0.0
    %185 = vmatpush1.msra.mxu0 0.0
    %186 = vmatprep.subr.mxu0 0.0
    %187 = vmatpush1.msra.mxu0 0.0
    %188 = vmatprep.subr.mxu0 0.0
    %189 = vmatpush1.msra.mxu0 0.0
    %190 = vmatprep.subr.mxu0 0.0
    %191 = vmatpush1.msra.mxu0 0.0
    %192 = vmatprep.subr.mxu0 0.0
    %193 = vmatpush1.msra.mxu0 0.0
    %194 = vmatprep.subr.mxu0 0.0
    %195 = vmatpush1.msra.mxu0 0.0
    %196 = vmatprep.subr.mxu0 0.0
    %197 = vmatpush1.msra.mxu0 0.0
    %198 = vmatprep.subr.mxu0 0.0
    %199 = vmatpush1.msra.mxu0 0.0
    %200 = vmatprep.subr.mxu0 0.0
    %201 = vmatpush1.msra.mxu0 0.0
    %202 = vmatprep.subr.mxu0 0.0
    %203 = vmatpush1.msra.mxu0 0.0
    %204 = vmatprep.subr.mxu0 0.0
    %205 = vmatpush1.msra.mxu0 0.0
    %206 = vmatprep.subr.mxu0 0.0
    %207 = vmatpush1.msra.mxu0 0.0
    %208 = vmatprep.subr.mxu0 0.0
    %209 = vmatpush1.msra.mxu0 0.0
    %210 = vmatprep.subr.mxu0 0.0
    %211 = vmatpush1.msra.mxu0 0.0
    %212 = vmatprep.subr.mxu0 0.0
    %213 = vmatpush1.msra.mxu0 0.0
    %214 = vmatprep.mubr.f32.mxu0 0.0
    %215 = vmatmul.mubr.f32.gmra.mrb[0].mxu0 %v124
    %v216 = vpop.f32.mrb[0].mxu0
    %v217 = vadd.f32 %v148, %v216
    %v218 = vpop.f32.mrb[0].mxu0
    %219 = vdwg.mxu0
    %v220 = vmax.f32 %v217, 0.0
    %s221 = scalar_lea.vmem [#allocation5], 256
    %v222 = vld [vmem:[%s221] sm:$0xff]
    %v223 = vld [vmem:[%s221 + $0x8] sm:$0xff]
    %v224 = vld [vmem:[%s221 + $0x10] sm:$0xff]
    %v225 = vld [vmem:[%s221 + $0x18] sm:$0xff]
    %v226 = vld [vmem:[%s221 + $0x20] sm:$0xff]
    %v227 = vld [vmem:[%s221 + $0x28] sm:$0xff]
    %v228 = vld [vmem:[%s221 + $0x30] sm:$0xff]
    %v229 = vld [vmem:[%s221 + $0x38] sm:$0xff]
    %v230 = vld [vmem:[%s221 + $0x40] sm:$0xff]
    %v231 = vld [vmem:[%s221 + $0x48] sm:$0xff]
    %v232 = vld [vmem:[%s221 + $0x50] sm:$0xff]
    %v233 = vld [vmem:[%s221 + $0x58] sm:$0xff]
    %v234 = vld [vmem:[%s221 + $0x60] sm:$0xff]
    %v235 = vld [vmem:[%s221 + $0x68] sm:$0xff]
    %v236 = vld [vmem:[%s221 + $0x70] sm:$0xff]
    %v237 = vld [vmem:[%s221 + $0x78] sm:$0xff]
    %s238 = scalar_lea.vmem %s2, 2
    %v239 = vld [vmem:[%s238] sm:$0x1]
    %v241 = vlaneseq
    %v242 = vshrl.u32 %v241, 7
    %v243 = vsub.s32 0, %v242
    %v244 = vrot.slane %v239, %v243
    %246 = vmatprep.subr.mxu0 0.0
    %247 = vmatpush1.msra.mxu0 %v222
    %248 = vmatprep.subr.mxu0 0.0
    %249 = vmatpush1.msra.mxu0 %v223
    %250 = vmatprep.subr.mxu0 0.0
    %251 = vmatpush1.msra.mxu0 %v224
    %252 = vmatprep.subr.mxu0 0.0
    %253 = vmatpush1.msra.mxu0 %v225
    %254 = vmatprep.subr.mxu0 0.0
    %255 = vmatpush1.msra.mxu0 %v226
    %256 = vmatprep.subr.mxu0 0.0
    %257 = vmatpush1.msra.mxu0 %v227
    %258 = vmatprep.subr.mxu0 0.0
    %259 = vmatpush1.msra.mxu0 %v228
    %260 = vmatprep.subr.mxu0 0.0
    %261 = vmatpush1.msra.mxu0 %v229
    %262 = vmatprep.subr.mxu0 0.0
    %263 = vmatpush1.msra.mxu0 %v230
    %264 = vmatprep.subr.mxu0 0.0
    %265 = vmatpush1.msra.mxu0 %v231
    %266 = vmatprep.subr.mxu0 0.0
    %267 = vmatpush1.msra.mxu0 %v232
    %268 = vmatprep.subr.mxu0 0.0
    %269 = vmatpush1.msra.mxu0 %v233
    %270 = vmatprep.subr.mxu0 0.0
    %271 = vmatpush1.msra.mxu0 %v234
    %272 = vmatprep.subr.mxu0 0.0
    %273 = vmatpush1.msra.mxu0 %v235
    %274 = vmatprep.subr.mxu0 0.0
    %275 = vmatpush1.msra.mxu0 %v236
    %276 = vmatprep.subr.mxu0 0.0
    %277 = vmatpush1.msra.mxu0 %v237
    %278 = vmatprep.subr.mxu0 0.0
    %279 = vmatpush1.msra.mxu0 0.0
    %280 = vmatprep.subr.mxu0 0.0
    %281 = vmatpush1.msra.mxu0 0.0
    %282 = vmatprep.subr.mxu0 0.0
    %283 = vmatpush1.msra.mxu0 0.0
    %284 = vmatprep.subr.mxu0 0.0
    %285 = vmatpush1.msra.mxu0 0.0
    %286 = vmatprep.subr.mxu0 0.0
    %287 = vmatpush1.msra.mxu0 0.0
    %288 = vmatprep.subr.mxu0 0.0
    %289 = vmatpush1.msra.mxu0 0.0
    %290 = vmatprep.subr.mxu0 0.0
    %291 = vmatpush1.msra.mxu0 0.0
    %292 = vmatprep.subr.mxu0 0.0
    %293 = vmatpush1.msra.mxu0 0.0
    %294 = vmatprep.subr.mxu0 0.0
    %295 = vmatpush1.msra.mxu0 0.0
    %296 = vmatprep.subr.mxu0 0.0
    %297 = vmatpush1.msra.mxu0 0.0
    %298 = vmatprep.subr.mxu0 0.0
    %299 = vmatpush1.msra.mxu0 0.0
    %300 = vmatprep.subr.mxu0 0.0
    %301 = vmatpush1.msra.mxu0 0.0
    %302 = vmatprep.subr.mxu0 0.0
    %303 = vmatpush1.msra.mxu0 0.0
    %304 = vmatprep.subr.mxu0 0.0
    %305 = vmatpush1.msra.mxu0 0.0
    %306 = vmatprep.subr.mxu0 0.0
    %307 = vmatpush1.msra.mxu0 0.0
    %308 = vmatprep.subr.mxu0 0.0
    %309 = vmatpush1.msra.mxu0 0.0
    %310 = vmatprep.mubr.f32.mxu0 0.0
    %311 = vmatmul.mubr.f32.gmra.mrb[0].mxu0 %v220
    %v312 = vpop.f32.mrb[0].mxu0
    %v313 = vadd.f32 %v244, %v312
    %v314 = vpop.f32.mrb[0].mxu0
    %315 = vdwg.mxu0
    %v316 = vmax.f32 %v313, 0.0
    %317 = vst.msk [vmem:[#allocation7] sm:$0xff] %vm50, %v316
    // Predicated region
    $region22: #{tpu_custom_call.1} parent=1 // pred_check
      _
    $region23: #{tpu_custom_call.1} parent=1 // pred_check_branch
      %319 = sbr.rel (0) target = $region25
    $region24: #{tpu_custom_call.1} parent=1 // pred_region
      %s321 = ssub.s32 128, 128
      %322 = vsyncadd [#allocation4], %s321
      %s324 = sshll.u32 [#allocation7], 4
      %s325 = int_to_ptr.vmem [resolvable:$true] %s324
      %327 = dma.vmem_to_hbm [thread:$0]  %s325, 128, %s3, [#allocation4]
    $region25: #{tpu_custom_call.1} parent=1 // pred_fallthru
      _
    // Predicated region
    $region26: #{tpu_custom_call.1} parent=1 // pred_check
      _
    $region27: #{tpu_custom_call.1} parent=1 // pred_check_branch
      %329 = sbr.rel (0) target = $region29
    $region28: #{tpu_custom_call.1} parent=1 // pred_region
      %330 = dma.done [#allocation4], 128
    $region29: #{tpu_custom_call.1} parent=1 // pred_fallthru
      _
    %331 = vsyncpa [#allocation3], 1
    %332 = vsyncpa [#allocation6], 1
    %333 = vsyncpa [#allocation4], 1

</llo_original>
